<compile_context>
chip_gen: v7x
topology: tpu7x:2x2x1
jax: 0.10.0
libtpu: 0.0.40
codegen_flags: <defaults>
</compile_context>

<pallas_src>
import functools

import jax
import jax.numpy as jnp
from jax.experimental import pallas as pl
from jax.experimental.pallas import tpu as pltpu

_LANE = 128
_TARGET_BLOCK_BYTES = 4 << 20   # ~4 MiB per input block, regardless of dtype


def _tensorcores_per_device():
    """2 on multi-TensorCore devices (v4/v5p megacore, v7x), 1 on v5e/v6e."""
    try:
        dev = jax.devices()[0]
        if dev.platform != "tpu":
            return 1
        kind = dev.device_kind.lower()
    except Exception:
        return 1
    # Single-TensorCore-per-device generations.
    if any(s in kind for s in ("lite", "v5e", "v6e", "v2", "v3")):
        return 1
    return 2


def _rmse_partial_kernel(p_ref, a_ref, o_ref, *, blk, bpc, rows):
    """Accumulate per-step (8,128) squared-diff partial sums into o_ref.

    p_ref, a_ref : (blk, 128) input tiles (native dtype)
    o_ref        : (1, 8, 128) f32 resident partial-sum slab for this core
    """
    c = pl.program_id(0)          # core / parallel axis
    j = pl.program_id(1)          # reduction axis (innermost, "arbitrary")

    @pl.when(j == 0)
    def _():
        o_ref[...] = jnp.zeros_like(o_ref)

    d = p_ref[...].astype(jnp.float32) - a_ref[...].astype(jnp.float32)
    sq = d * d

    # NOTE: int32 row math overflows only for n >~ 2.7e11 elements.
    row_start = (c * bpc + j) * blk
    is_interior = row_start + blk <= rows   # scalar

    # Hot path: interior blocks need no mask — just the in-register
    # (blk,128)->(8,128) elementwise reduction (whole-vreg adds, no XLU).
    @pl.when(is_interior)
    def _():
        o_ref[0] += sq.reshape(blk // 8, 8, _LANE).sum(axis=0)

    # Cold path: clipped edge block or duplicate parallel-axis step.
    @pl.when(jnp.logical_not(is_interior))
    def _():
        row_ids = row_start + jax.lax.broadcasted_iota(jnp.int32, (blk, _LANE), 0)
        sq_m = jnp.where(row_ids < rows, sq, 0.0)   # keep as select, not multiply
        o_ref[0] += sq_m.reshape(blk // 8, 8, _LANE).sum(axis=0)


def rmse_loss(pred, actual):
    """Pallas equivalent of torch.sqrt(torch.nn.MSELoss()(pred, actual))."""
    assert pred.shape == actual.shape, "pred/actual must have the same shape"
    assert pred.dtype == actual.dtype, "pred/actual must have the same dtype"
    n = pred.size

    # Sublane alignment for the packed native dtype: f32 -> 8, bf16 -> 16, i8 -> 32.
    itemsize = pred.dtype.itemsize
    packing = max(1, 4 // itemsize)
    sub_align = 8 * packing
    chunk = sub_align * _LANE

    p_flat = pred.reshape(-1)
    a_flat = actual.reshape(-1)

    n_main = (n // chunk) * chunk      # chunk-divisible prefix handled by Pallas
    total_sq = jnp.float32(0.0)

    if n_main > 0:
        rows = n_main // _LANE         # multiple of sub_align

        # Dtype-aware block: constant ~4 MiB per input block.
        blk_target = max(sub_align, _TARGET_BLOCK_BYTES // (_LANE * itemsize))
        blk_target = (blk_target // sub_align) * sub_align
        blk = min(blk_target, rows)

        grid_rows = pl.cdiv(rows, blk)
        ncores = max(1, min(_tensorcores_per_device(), grid_rows))
        bpc = pl.cdiv(grid_rows, ncores)   # blocks per core

        p2 = p_flat[:n_main].reshape(rows, _LANE)
        a2 = a_flat[:n_main].reshape(rows, _LANE)

        def in_map(c, j):
            # Clamp so "extra" steps on the parallel axis still issue a valid
            # DMA; the in-kernel masked path zeroes their contribution.
            return (jnp.minimum(c * bpc + j, grid_rows - 1), 0)

        # 2 inputs x 2 pipeline buffers x block_bytes, plus headroom.
        block_bytes = blk * _LANE * itemsize
        vmem_limit = int(min(max(4 * block_bytes + (4 << 20), 16 << 20), 48 << 20))

        partials = pl.pallas_call(
            functools.partial(_rmse_partial_kernel, blk=blk, bpc=bpc, rows=rows),
            out_shape=jax.ShapeDtypeStruct((ncores, 8, _LANE), jnp.float32),
            grid_spec=pltpu.PrefetchScalarGridSpec(
                num_scalar_prefetch=0,
                grid=(ncores, bpc),
                in_specs=[
                    pl.BlockSpec((blk, _LANE), in_map),
                    pl.BlockSpec((blk, _LANE), in_map),
                ],
                out_specs=pl.BlockSpec((1, 8, _LANE), lambda c, j: (c, 0, 0)),
            ),
            compiler_params=pltpu.CompilerParams(
                dimension_semantics=("parallel", "arbitrary"),
                vmem_limit_bytes=vmem_limit),
        )(p2, a2)
        total_sq = total_sq + jnp.sum(partials)

    # Ragged tail (< chunk elements) handled in plain JAX — avoids the
    # host-side jnp.pad copy of both full inputs.
    tail = n - n_main
    if tail:
        dt = p_flat[n_main:].astype(jnp.float32) - a_flat[n_main:].astype(jnp.float32)
        total_sq = total_sq + jnp.sum(dt * dt)

    # Mean over the TRUE element count, then sqrt.
    return jnp.sqrt(total_sq / jnp.float32(n))


if __name__ == "__main__":
    key = jax.random.PRNGKey(0)
    k1, k2, k3, k4 = jax.random.split(key, 4)

    # Small NCHW-like shapes consistent with a generic prediction/target pair.
    pred = jax.random.normal(k1, (2, 4, 16, 16), dtype=jnp.float32)
    actual = jax.random.normal(k2, (2, 4, 16, 16), dtype=jnp.float32)

    result = jax.block_until_ready(rmse_loss(pred, actual))
    ref = jnp.sqrt(jnp.mean((pred - actual) ** 2))
    assert jnp.allclose(result, ref, rtol=1e-5, atol=1e-6), (result, ref)

    # Ragged-size check: exercises kernel prefix + plain-JAX tail path.
    pred_r = jax.random.normal(k3, (5, 300), dtype=jnp.float32)
    actual_r = jax.random.normal(k4, (5, 300), dtype=jnp.float32)
    result_r = jax.block_until_ready(rmse_loss(pred_r, actual_r))
    ref_r = jnp.sqrt(jnp.mean((pred_r - actual_r) ** 2))
    assert jnp.allclose(result_r, ref_r, rtol=1e-5, atol=1e-6), (result_r, ref_r)

    print("KERNEL_OK")
</pallas_src>

<mosaic_0001>
module attributes {stable_mosaic.version = 11 : i64} {
  func.func @_rmse_partial_kernel(%arg0: i32, %arg1: i32, %arg2: memref<16x128xf32, #tpu.memory_space<vmem>>, %arg3: memref<16x128xf32, #tpu.memory_space<vmem>>, %arg4: memref<1x8x128xf32, #tpu.memory_space<vmem>>) attributes {dimension_semantics = [#tpu.dimension_semantics<parallel>, #tpu.dimension_semantics<arbitrary>], iteration_bounds = array<i64: 1, 1>, scalar_prefetch = 0 : i64, scratch_operands = 0 : i64, tpu.core_type = #tpu.core_type<tc>, window_params = [{transform_indices = @transform_0, window_bounds = array<i64: 16, 128>}, {transform_indices = @transform_1, window_bounds = array<i64: 16, 128>}, {transform_indices = @transform_2, window_bounds = array<i64: 1, 8, 128>}]} {
    %c0_i32 = arith.constant 0 : i32
    %0 = arith.cmpi eq, %arg1, %c0_i32 : i32
    %1 = arith.extui %0 : i1 to i32
    %c0_i32_0 = arith.constant 0 : i32
    %2 = arith.cmpi ne, %1, %c0_i32_0 : i32
    scf.if %2 {
      %cst = arith.constant 0.000000e+00 : f32
      %17 = vector.broadcast %cst : f32 to vector<1x8x128xf32>
      %c0_8 = arith.constant 0 : index
      %c0_9 = arith.constant 0 : index
      %c0_10 = arith.constant 0 : index
      %18 = vector.load %arg4[%c0_8, %c0_9, %c0_10] : memref<1x8x128xf32, #tpu.memory_space<vmem>>, vector<1x8x128xf32>
      tpu.vector_store %arg4[%c0_8, %c0_9, %c0_10], %17 {strides = array<i32>} : memref<1x8x128xf32, #tpu.memory_space<vmem>>, vector<1x8x128xf32>,
    } else {
    }
    %c0 = arith.constant 0 : index
    %c0_1 = arith.constant 0 : index
    %3 = vector.load %arg2[%c0, %c0_1] : memref<16x128xf32, #tpu.memory_space<vmem>>, vector<16x128xf32>
    %c0_2 = arith.constant 0 : index
    %c0_3 = arith.constant 0 : index
    %4 = vector.load %arg3[%c0_2, %c0_3] : memref<16x128xf32, #tpu.memory_space<vmem>>, vector<16x128xf32>
    %5 = arith.subf %3, %4 : vector<16x128xf32>
    %6 = arith.mulf %5, %5 : vector<16x128xf32>
    %c1_i32 = arith.constant 1 : i32
    %7 = arith.muli %arg0, %c1_i32 : i32
    %8 = arith.addi %7, %arg1 : i32
    %c16_i32 = arith.constant 16 : i32
    %9 = arith.muli %8, %c16_i32 : i32
    %c16_i32_4 = arith.constant 16 : i32
    %10 = arith.addi %9, %c16_i32_4 : i32
    %c16_i32_5 = arith.constant 16 : i32
    %11 = arith.cmpi sle, %10, %c16_i32_5 : i32
    %12 = arith.extui %11 : i1 to i32
    %c0_i32_6 = arith.constant 0 : i32
    %13 = arith.cmpi ne, %12, %c0_i32_6 : i32
    scf.if %13 {
      %c0_8 = arith.constant 0 : index
      %c0_9 = arith.constant 0 : index
      %c0_10 = arith.constant 0 : index
      %17 = vector.load %arg4[%c0_8, %c0_9, %c0_10] : memref<1x8x128xf32, #tpu.memory_space<vmem>>, vector<1x8x128xf32>
      %18 = vector.shape_cast %17 : vector<1x8x128xf32> to vector<8x128xf32>
      %19 = vector.shape_cast %6 : vector<16x128xf32> to vector<2x8x128xf32>
      %cst = arith.constant dense<0.000000e+00> : vector<8x128xf32>
      %20 = vector.multi_reduction <add>, %19, %cst [0] : vector<2x8x128xf32> to vector<8x128xf32>
      %21 = arith.addf %18, %20 : vector<8x128xf32>
      %c0_11 = arith.constant 0 : index
      %c0_12 = arith.constant 0 : index
      %c0_13 = arith.constant 0 : index
      %22 = vector.load %arg4[%c0_11, %c0_12, %c0_13] : memref<1x8x128xf32, #tpu.memory_space<vmem>>, vector<1x8x128xf32>
      %23 = vector.shape_cast %22 : vector<1x8x128xf32> to vector<8x128xf32>
      %24 = vector.shape_cast %21 : vector<8x128xf32> to vector<1x8x128xf32>
      tpu.vector_store %arg4[%c0_11, %c0_12, %c0_13], %24 {strides = array<i32>} : memref<1x8x128xf32, #tpu.memory_space<vmem>>, vector<1x8x128xf32>,
    } else {
    }
    %true = arith.constant true
    %14 = arith.xori %11, %true : i1
    %15 = arith.extui %14 : i1 to i32
    %c0_i32_7 = arith.constant 0 : i32
    %16 = arith.cmpi ne, %15, %c0_i32_7 : i32
    scf.if %16 {
      %17 = tpu.iota {dimensions = array<i32: 0>} : vector<16x128xi32>
      %18 = vector.broadcast %9 : i32 to vector<16x128xi32>
      %19 = arith.addi %18, %17 : vector<16x128xi32>
      %c16_i32_8 = arith.constant 16 : i32
      %20 = vector.broadcast %c16_i32_8 : i32 to vector<16x128xi32>
      %21 = arith.cmpi slt, %19, %20 : vector<16x128xi32>
      %cst = arith.constant 0.000000e+00 : f32
      %22 = vector.broadcast %cst : f32 to vector<16x128xf32>
      %23 = arith.select %21, %6, %22 : vector<16x128xi1>, vector<16x128xf32>
      %c0_9 = arith.constant 0 : index
      %c0_10 = arith.constant 0 : index
      %c0_11 = arith.constant 0 : index
      %24 = vector.load %arg4[%c0_9, %c0_10, %c0_11] : memref<1x8x128xf32, #tpu.memory_space<vmem>>, vector<1x8x128xf32>
      %25 = vector.shape_cast %24 : vector<1x8x128xf32> to vector<8x128xf32>
      %26 = vector.shape_cast %23 : vector<16x128xf32> to vector<2x8x128xf32>
      %cst_12 = arith.constant dense<0.000000e+00> : vector<8x128xf32>
      %27 = vector.multi_reduction <add>, %26, %cst_12 [0] : vector<2x8x128xf32> to vector<8x128xf32>
      %28 = arith.addf %25, %27 : vector<8x128xf32>
      %c0_13 = arith.constant 0 : index
      %c0_14 = arith.constant 0 : index
      %c0_15 = arith.constant 0 : index
      %29 = vector.load %arg4[%c0_13, %c0_14, %c0_15] : memref<1x8x128xf32, #tpu.memory_space<vmem>>, vector<1x8x128xf32>
      %30 = vector.shape_cast %29 : vector<1x8x128xf32> to vector<8x128xf32>
      %31 = vector.shape_cast %28 : vector<8x128xf32> to vector<1x8x128xf32>
      tpu.vector_store %arg4[%c0_13, %c0_14, %c0_15], %31 {strides = array<i32>} : memref<1x8x128xf32, #tpu.memory_space<vmem>>, vector<1x8x128xf32>,
    } else {
    }
    return
  }
  func.func @transform_0(%arg0: i32, %arg1: i32) -> (i32, i32) {
    %c1_i32 = arith.constant 1 : i32
    %0 = arith.muli %arg0, %c1_i32 : i32
    %1 = arith.addi %0, %arg1 : i32
    %c0_i32 = arith.constant 0 : i32
    %2 = arith.minsi %1, %c0_i32 : i32
    %c0_i32_0 = arith.constant 0 : i32
    %c0_i32_1 = arith.constant 0 : i32
    return %2, %c0_i32_0 : i32, i32
  }
  func.func @transform_1(%arg0: i32, %arg1: i32) -> (i32, i32) {
    %c1_i32 = arith.constant 1 : i32
    %0 = arith.muli %arg0, %c1_i32 : i32
    %1 = arith.addi %0, %arg1 : i32
    %c0_i32 = arith.constant 0 : i32
    %2 = arith.minsi %1, %c0_i32 : i32
    %c0_i32_0 = arith.constant 0 : i32
    %c0_i32_1 = arith.constant 0 : i32
    return %2, %c0_i32_0 : i32, i32
  }
  func.func @transform_2(%arg0: i32, %arg1: i32) -> (i32, i32, i32) {
    %c0_i32 = arith.constant 0 : i32
    %c0_i32_0 = arith.constant 0 : i32
    %c0_i32_1 = arith.constant 0 : i32
    return %arg0, %c0_i32, %c0_i32_0 : i32, i32, i32
  }
}

</mosaic_0001>

<llo_original>
// kernel: tpu_custom_call.1
$region0: #{tpu_custom_call.1}
  #allocation0 [shape = 'u32[]', space=smem, size = 0x4, offset = 0x4, fixed_abs, tag = 'smem constant byte address 0x4 - core index']
  #allocation1 [shape = 'u32[144,128]{1,0:T(1,128)}', space=vmem, size = 0x12000, scoped, tag = 'internal scratch']
  %s0 = inlined_call_operand.hbm [shape: f32[16,128], index: 0, kind: input, shape index: {}]
  %s1 = inlined_call_operand.hbm [shape: f32[16,128], index: 1, kind: input, shape index: {}]
  %s2 = inlined_call_operand.hbm [shape: f32[1,8,128], index: 2, kind: output, shape index: {}]
  %s3 = sld [smem:[#allocation0]]
  $region38: #{tpu_custom_call.1} parent=0
    _
  %s5 = ssub.s32 1, %s3
  %s6 = scalar_select 0, %s5, %s3
  $region1: #{tpu_custom_call.1} parent=0
    #allocation2 [shape = 'u8[8192]{0}', space=vmem, size = 0x2000, scoped, tag = 'input window, operand 0, single buffered']
    #allocation3 [shape = 's32[1]{0}', space=sflag, size = 0x4, scoped, tag = 'scoped memory for tpu_custom_call.1']
    #allocation4 [shape = 's32[1]{0}', space=sflag, size = 0x4, scoped, tag = 'scoped memory for tpu_custom_call.1']
    #allocation5 [shape = 'u8[8192]{0}', space=vmem, size = 0x2000, scoped, tag = 'input window, operand 1, single buffered']
    #allocation6 [shape = 's32[1]{0}', space=sflag, size = 0x4, scoped, tag = 'scoped memory for tpu_custom_call.1']
    #allocation7 [shape = 'u8[4096]{0}', space=vmem, size = 0x1000, scoped, tag = 'output window, operand 0, single buffered']
    %7 = vsyncpa [#allocation3], 0
    %8 = vsyncpa [#allocation6], 0
    %9 = vsyncpa [#allocation4], 0
    // Predicated region
    $region2: #{tpu_custom_call.1} parent=1 // pred_check
      _
    $region3: #{tpu_custom_call.1} parent=1 // pred_check_branch
      %11 = sbr.rel (0) target = $region5
    $region4: #{tpu_custom_call.1} parent=1 // pred_region
      %s12 = sadd.s32 0, 0
      %p13 = scmp.lt.s32.totalorder %s12, 0
      %s14 = scalar_select %p13, %s12, 0
      %s15 = smul.u32 2, %s14
      %s17 = ssub.s32 256, 256
      %18 = vsyncadd [#allocation3], %s17
      %s19 = smul.addr %s15, 128
      %s20 = scalar_lea.hbm %s0, %s19
      %s21 = sshll.u32 [#allocation2], 4
      %s22 = int_to_ptr.vmem [resolvable:$true] %s21
      %27 = dma.hbm_to_vmem [thread:$0]  %s20, 256, %s22, [#allocation3], 128, 128, 8
    $region5: #{tpu_custom_call.1} parent=1 // pred_fallthru
      _
    // Predicated region
    $region6: #{tpu_custom_call.1} parent=1 // pred_check
      _
    $region7: #{tpu_custom_call.1} parent=1 // pred_check_branch
      %29 = sbr.rel (0) target = $region9
    $region8: #{tpu_custom_call.1} parent=1 // pred_region
      %s30 = sadd.s32 0, 0
      %p31 = scmp.lt.s32.totalorder %s30, 0
      %s32 = scalar_select %p31, %s30, 0
      %s33 = smul.u32 2, %s32
      %s35 = ssub.s32 256, 256
      %36 = vsyncadd [#allocation6], %s35
      %s37 = smul.addr %s33, 128
      %s38 = scalar_lea.hbm %s1, %s37
      %s39 = sshll.u32 [#allocation5], 4
      %s40 = int_to_ptr.vmem [resolvable:$true] %s39
      %45 = dma.hbm_to_vmem [thread:$0]  %s38, 256, %s40, [#allocation6], 128, 128, 8
    $region9: #{tpu_custom_call.1} parent=1 // pred_fallthru
      _
    // Predicated region
    $region10: #{tpu_custom_call.1} parent=1 // pred_check
      _
    $region11: #{tpu_custom_call.1} parent=1 // pred_check_branch
      %47 = sbr.rel (0) target = $region13
    $region12: #{tpu_custom_call.1} parent=1 // pred_region
      %48 = dma.done [#allocation3], 256
    $region13: #{tpu_custom_call.1} parent=1 // pred_fallthru
      _
    // Predicated region
    $region14: #{tpu_custom_call.1} parent=1 // pred_check
      _
    $region15: #{tpu_custom_call.1} parent=1 // pred_check_branch
      %50 = sbr.rel (0) target = $region17
    $region16: #{tpu_custom_call.1} parent=1 // pred_region
      %51 = dma.done [#allocation6], 256
    $region17: #{tpu_custom_call.1} parent=1 // pred_fallthru
      _
    %s52 = sadd.s32 0, 0
    %p53 = scmp.lt.s32.totalorder %s52, 0
    %s54 = scalar_select %p53, %s52, 0
    %s55 = smul.u32 2, %s54
    %s56 = sadd.s32 0, 0
    %p57 = scmp.lt.s32.totalorder %s56, 0
    %s58 = scalar_select %p57, %s56, 0
    %s59 = smul.u32 2, %s58
    %p60 = scmp.eq.s32.totalorder 0, 0
    // Predicated region
    $region18: #{tpu_custom_call.1} parent=1 // pred_check
      %p61 = pneg %p60
    $region19: #{tpu_custom_call.1} parent=1 // pred_check_branch
      %63 = sbr.rel (%p61) target = $region21
    $region20: #{tpu_custom_call.1} parent=1 // pred_region
      %64 = vst [vmem:[#allocation7] sm:$0xff] 0.0
    $region21: #{tpu_custom_call.1} parent=1 // pred_fallthru
      _
    %v65 = vld [vmem:[#allocation2] sm:$0xff]
    %v66 = vld [vmem:[#allocation2 + $0x8] sm:$0xff]
    %v67 = vld [vmem:[#allocation5] sm:$0xff]
    %v68 = vld [vmem:[#allocation5 + $0x8] sm:$0xff]
    %v69 = vsub.f32 %v65, %v67
    %v70 = vsub.f32 %v66, %v68
    %v71 = vmul.f32 %v69, %v69
    %v72 = vmul.f32 %v70, %v70
    %s73 = sadd.s32 0, 0
    %s74 = smul.u32 %s73, 16
    %s75 = sadd.s32 %s74, 16
    %p76 = scmp.le.s32.totalorder %s75, 16
    // Predicated region
    $region22: #{tpu_custom_call.1} parent=1 // pred_check
      %p77 = pneg %p76
    $region23: #{tpu_custom_call.1} parent=1 // pred_check_branch
      %79 = sbr.rel (%p77) target = $region25
    $region24: #{tpu_custom_call.1} parent=1 // pred_region
      %v80 = vld [vmem:[#allocation7] sm:$0xff]
      %v81 = vadd.f32 %v71, %v72
      %v82 = vadd.f32 %v80, %v81
      %83 = vst [vmem:[#allocation7] sm:$0xff] %v82
    $region25: #{tpu_custom_call.1} parent=1 // pred_fallthru
      _
    %p84 = scmp.gt.s32.totalorder %s75, 16
    // Predicated region
    $region26: #{tpu_custom_call.1} parent=1 // pred_check
      %p85 = pneg %p84
    $region27: #{tpu_custom_call.1} parent=1 // pred_check_branch
      %87 = sbr.rel (%p85) target = $region29
    $region28: #{tpu_custom_call.1} parent=1 // pred_region
      %v88 = vlaneseq
      %v89 = vshrl.u32 %v88, 7
      %v90 = vadd.s32 %v89, 8
      %v91 = vstv %s74
      %v92 = vadd.s32 %v91, %v89
      %v93 = vadd.s32 %v91, %v90
      %vm94 = vcmp.lt.s32.totalorder %v92, 16
      %vm95 = vcmp.lt.s32.totalorder %v93, 16
      %v96 = vsel %vm94, %v71, 0.0
      %v97 = vsel %vm95, %v72, 0.0
      %v98 = vld [vmem:[#allocation7] sm:$0xff]
      %v99 = vadd.f32 %v96, %v97
      %v100 = vadd.f32 %v98, %v99
      %101 = vst [vmem:[#allocation7] sm:$0xff] %v100
    $region29: #{tpu_custom_call.1} parent=1 // pred_fallthru
      _
    // Predicated region
    $region30: #{tpu_custom_call.1} parent=1 // pred_check
      _
    $region31: #{tpu_custom_call.1} parent=1 // pred_check_branch
      %103 = sbr.rel (0) target = $region33
    $region32: #{tpu_custom_call.1} parent=1 // pred_region
      %s105 = ssub.s32 128, 128
      %106 = vsyncadd [#allocation4], %s105
      %s108 = sshll.u32 [#allocation7], 4
      %s109 = int_to_ptr.vmem [resolvable:$true] %s108
      %111 = dma.vmem_to_hbm [thread:$0]  %s109, 128, %s2, [#allocation4]
    $region33: #{tpu_custom_call.1} parent=1 // pred_fallthru
      _
    // Predicated region
    $region34: #{tpu_custom_call.1} parent=1 // pred_check
      _
    $region35: #{tpu_custom_call.1} parent=1 // pred_check_branch
      %113 = sbr.rel (0) target = $region37
    $region36: #{tpu_custom_call.1} parent=1 // pred_region
      %114 = dma.done [#allocation4], 128
    $region37: #{tpu_custom_call.1} parent=1 // pred_fallthru
      _
    %115 = vsyncpa [#allocation3], 1
    %116 = vsyncpa [#allocation6], 1
    %117 = vsyncpa [#allocation4], 1

</llo_original>
